<compile_context>
chip_gen: v7x
topology: tpu7x:2x2x1
jax: 0.10.0
libtpu: 0.0.40
codegen_flags: <defaults>
</compile_context>

<pallas_src>
import functools

import jax
import jax.numpy as jnp
from jax.experimental import pallas as pl
from jax.experimental.pallas import tpu as pltpu

_LANE = 128
_SUBLANE = 8
_VMEM_BUDGET = 24 * 1024 * 1024          # target working set (double-buffered)
_VMEM_LIMIT = 48 * 1024 * 1024           # safe on v5e/v6e (128 MiB) and v7x (64 MiB)


def _round_up(x, m):
    return ((x + m - 1) // m) * m


def _choose_tile(dim, cap, align):
    """Pick (tile, padded_dim): largest tile <= cap with small zero-padding."""
    d = _round_up(dim, align)
    if d <= cap:
        return d, d
    t = cap
    while t >= align * 2:
        pad = _round_up(d, t) - d
        if pad * 8 <= d:                 # <= ~12.5% padding overhead
            break
        t //= 2
    t = max(t, align)
    return t, _round_up(d, t)


def _pad2d(a, rows, cols):
    pr, pc = rows - a.shape[0], cols - a.shape[1]
    if pr or pc:
        a = jnp.pad(a, ((0, pr), (0, pc)))
    return a


def _linear_kernel(x_ref, w_ref, b_ref, o_ref, *scratch, apply_relu):
    """One (tm, tn) output tile; grid axis 2 reduces over K.

    If no scratch is supplied the (f32) output block itself is the accumulator
    (it stays resident in VMEM across the K axis).  The accumulator is seeded
    with the broadcast bias so no separate bias-add pass is needed.
    """
    acc_ref = scratch[0] if scratch else o_ref
    k = pl.program_id(2)

    @pl.when(k == 0)
    def _init():
        acc_ref[...] = jnp.broadcast_to(
            b_ref[...].astype(acc_ref.dtype), acc_ref.shape
        )

    acc_ref[...] += jnp.dot(
        x_ref[...], w_ref[...], preferred_element_type=jnp.float32
    ).astype(acc_ref.dtype)

    # Epilogue only needed if we must ReLU or copy out of a scratch accumulator.
    if apply_relu or scratch:
        @pl.when(k == pl.num_programs(2) - 1)
        def _finalize():
            y = acc_ref[...]
            if apply_relu:
                y = jnp.maximum(y, 0.0)
            o_ref[...] = y.astype(o_ref.dtype)


def linear_pallas(x, w_t, b, *, apply_relu, compute_dtype=None):
    """y = x @ w_t + b (optional ReLU). x:(M,K), w_t:(K,N), b:(N,)."""
    M, K = x.shape
    K2, N = w_t.shape
    assert K == K2, (K, K2)
    out_dtype = x.dtype
    op_dtype = compute_dtype if compute_dtype is not None else x.dtype

    # --- tile selection (large tiles; pad dims to tile multiples) ----------
    tm, Mp = _choose_tile(M, cap=512, align=_SUBLANE)
    tn, Np = _choose_tile(N, cap=512, align=_LANE)
    tk, Kp = _choose_tile(K, cap=2048, align=_LANE)   # full K where it fits

    in_bytes = jnp.dtype(op_dtype).itemsize
    out_bytes = jnp.dtype(out_dtype).itemsize
    use_acc = out_dtype != jnp.float32     # f32 output accumulates in place

    def _vmem_est(tm_, tn_, tk_):
        est = 2 * (tm_ * tk_ * in_bytes + tk_ * tn_ * in_bytes
                   + tm_ * tn_ * out_bytes + tn_ * 4)
        if use_acc:
            est += tm_ * tn_ * 4
        return est

    # Safety net: shrink tk / tn (keeping 128-alignment) if we'd blow VMEM.
    while _vmem_est(tm, tn, tk) > _VMEM_BUDGET and tk % 256 == 0 and tk > _LANE:
        tk //= 2
    while _vmem_est(tm, tn, tk) > _VMEM_BUDGET and tn % 256 == 0 and tn > _LANE:
        tn //= 2

    # --- zero-pad operands to tile multiples --------------------------------
    x_p = _pad2d(x, Mp, Kp)
    w_p = _pad2d(w_t, Kp, Np)
    b_p = _pad2d(b.reshape(1, N).astype(jnp.float32), 1, Np)
    if compute_dtype is not None:
        x_p = x_p.astype(compute_dtype)
        w_p = w_p.astype(compute_dtype)

    grid = (Mp // tm, Np // tn, Kp // tk)
    scratch_shapes = [pltpu.VMEM((tm, tn), jnp.float32)] if use_acc else []

    kernel = functools.partial(_linear_kernel, apply_relu=apply_relu)

    cost = pl.CostEstimate(
        flops=2 * Mp * Kp * Np,
        transcendentals=0,
        bytes_accessed=(Mp * Kp * in_bytes + Kp * Np * in_bytes
                        + Np * 4 + Mp * Np * out_bytes),
    )

    out = pl.pallas_call(
        kernel,
        out_shape=jax.ShapeDtypeStruct((Mp, Np), out_dtype),
        grid_spec=pltpu.PrefetchScalarGridSpec(
            num_scalar_prefetch=0,
            grid=grid,
            in_specs=[
                pl.BlockSpec((tm, tk), lambda i, j, k: (i, k)),
                pl.BlockSpec((tk, tn), lambda i, j, k: (k, j)),
                pl.BlockSpec((1, tn), lambda i, j, k: (0, j)),
            ],
            out_specs=pl.BlockSpec((tm, tn), lambda i, j, k: (i, j)),
            scratch_shapes=scratch_shapes,
        ),
        compiler_params=pltpu.CompilerParams(
            dimension_semantics=("parallel", "parallel", "arbitrary"),
            vmem_limit_bytes=_VMEM_LIMIT,
        ),
        cost_estimate=cost,
    )(x_p, w_p, b_p)

    if Mp != M or Np != N:
        out = out[:M, :N]
    return out


def init_ffn_params(key, d_input, d_output, num_hidden_layers=4, d_hidden=2048):
    """Deterministic params matching the torch module's layer shapes.

    Returns a list of (W_T, b) with W_T already transposed to (in, out).
    Layer count = num_hidden_layers + 1, ReLU after every layer but the last,
    exactly like the nn.Sequential in FFN.__init__.
    """
    dims = [d_input] + [d_hidden] * num_hidden_layers + [d_output]
    params = []
    for i in range(len(dims) - 1):
        fan_in, fan_out = dims[i], dims[i + 1]
        key, kw, kb = jax.random.split(key, 3)
        bound = 1.0 / jnp.sqrt(fan_in)
        # torch.nn.Linear weight is (out, in); we store its transpose (in, out).
        w_t = jax.random.uniform(
            kw, (fan_in, fan_out), jnp.float32, minval=-bound, maxval=bound
        )
        b = jax.random.uniform(
            kb, (fan_out,), jnp.float32, minval=-bound, maxval=bound
        )
        params.append((w_t, b))
    return params


def ffn_forward(params, x, *, compute_dtype=None):
    """x: (..., d_input) -> (..., d_output). Each layer runs the Pallas kernel."""
    lead_shape = x.shape[:-1]
    h = x.reshape(-1, x.shape[-1])
    n_layers = len(params)
    for idx, (w_t, b) in enumerate(params):
        is_last = idx == n_layers - 1
        h = linear_pallas(h, w_t, b, apply_relu=not is_last,
                          compute_dtype=compute_dtype)
    return h.reshape(*lead_shape, h.shape[-1])


def ffn_reference(params, x):
    h = x.reshape(-1, x.shape[-1])
    n_layers = len(params)
    for idx, (w_t, b) in enumerate(params):
        h = h @ w_t + b
        if idx != n_layers - 1:
            h = jnp.maximum(h, 0.0)
    return h.reshape(*x.shape[:-1], h.shape[-1])


if __name__ == "__main__":
    # Small shapes consistent with the module: (batch, seq, d_input) tokens.
    batch, seq = 2, 8
    d_input = 32
    d_output = 32
    num_hidden_layers = 4
    d_hidden = 128  # small stand-in for the default 2048

    key = jax.random.PRNGKey(0)
    key, kx = jax.random.split(key)
    x = jax.random.normal(kx, (batch, seq, d_input), dtype=jnp.float32)

    params = init_ffn_params(key, d_input, d_output, num_hidden_layers, d_hidden)

    # f32 path (matches the PyTorch module's numerics).
    out = jax.block_until_ready(ffn_forward(params, x))
    ref = ffn_reference(params, x)
    assert out.shape == (batch, seq, d_output)
    assert jnp.allclose(out, ref, atol=1e-4, rtol=1e-4), float(
        jnp.max(jnp.abs(out - ref))
    )

    print("KERNEL_OK")
</pallas_src>

<mosaic_0001>
module attributes {stable_mosaic.version = 11 : i64} {
  func.func @_linear_kernel(%arg0: i32, %arg1: i32, %arg2: i32, %arg3: memref<16x128xf32, #tpu.memory_space<vmem>>, %arg4: memref<128x128xf32, #tpu.memory_space<vmem>>, %arg5: memref<1x128xf32, #tpu.memory_space<vmem>>, %arg6: memref<16x128xf32, #tpu.memory_space<vmem>>) attributes {dimension_semantics = [#tpu.dimension_semantics<parallel>, #tpu.dimension_semantics<parallel>, #tpu.dimension_semantics<arbitrary>], iteration_bounds = array<i64: 1, 1, 1>, scalar_prefetch = 0 : i64, scratch_operands = 0 : i64, tpu.core_type = #tpu.core_type<tc>, window_params = [{transform_indices = @transform_0, window_bounds = array<i64: 16, 128>}, {transform_indices = @transform_1, window_bounds = array<i64: 128, 128>}, {transform_indices = @transform_2, window_bounds = array<i64: 1, 128>}, {transform_indices = @transform_3, window_bounds = array<i64: 16, 128>}]} {
    %c0_i32 = arith.constant 0 : i32
    %0 = arith.cmpi eq, %arg2, %c0_i32 : i32
    %1 = arith.extui %0 : i1 to i32
    %c0_i32_0 = arith.constant 0 : i32
    %2 = arith.cmpi ne, %1, %c0_i32_0 : i32
    scf.if %2 {
      %c0_10 = arith.constant 0 : index
      %c0_11 = arith.constant 0 : index
      %12 = vector.load %arg5[%c0_10, %c0_11] : memref<1x128xf32, #tpu.memory_space<vmem>>, vector<1x128xf32>
      %13 = vector.shape_cast %12 : vector<1x128xf32> to vector<1x128xf32>
      %14 = vector.broadcast %13 : vector<1x128xf32> to vector<16x128xf32>
      %c0_12 = arith.constant 0 : index
      %c0_13 = arith.constant 0 : index
      %15 = vector.load %arg6[%c0_12, %c0_13] : memref<16x128xf32, #tpu.memory_space<vmem>>, vector<16x128xf32>
      tpu.vector_store %arg6[%c0_12, %c0_13], %14 {strides = array<i32>} : memref<16x128xf32, #tpu.memory_space<vmem>>, vector<16x128xf32>,
    } else {
    }
    %c0 = arith.constant 0 : index
    %c0_1 = arith.constant 0 : index
    %3 = vector.load %arg6[%c0, %c0_1] : memref<16x128xf32, #tpu.memory_space<vmem>>, vector<16x128xf32>
    %c0_2 = arith.constant 0 : index
    %c0_3 = arith.constant 0 : index
    %4 = vector.load %arg3[%c0_2, %c0_3] : memref<16x128xf32, #tpu.memory_space<vmem>>, vector<16x128xf32>
    %c0_4 = arith.constant 0 : index
    %c0_5 = arith.constant 0 : index
    %5 = vector.load %arg4[%c0_4, %c0_5] : memref<128x128xf32, #tpu.memory_space<vmem>>, vector<128x128xf32>
    %cst = arith.constant dense<0.000000e+00> : vector<16x128xf32>
    %6 = tpu.matmul %4, %5, %cst {dimension_numbers = #tpu.dot_dimension_numbers<[1], [0], [0], [1], [0, 0, 1, 1], [], []>} : vector<16x128xf32>, vector<128x128xf32>, vector<16x128xf32> -> vector<16x128xf32>
    %7 = arith.addf %3, %6 : vector<16x128xf32>
    %c0_6 = arith.constant 0 : index
    %c0_7 = arith.constant 0 : index
    %8 = vector.load %arg6[%c0_6, %c0_7] : memref<16x128xf32, #tpu.memory_space<vmem>>, vector<16x128xf32>
    tpu.vector_store %arg6[%c0_6, %c0_7], %7 {strides = array<i32>} : memref<16x128xf32, #tpu.memory_space<vmem>>, vector<16x128xf32>,
    %c0_i32_8 = arith.constant 0 : i32
    %9 = arith.cmpi eq, %arg2, %c0_i32_8 : i32
    %10 = arith.extui %9 : i1 to i32
    %c0_i32_9 = arith.constant 0 : i32
    %11 = arith.cmpi ne, %10, %c0_i32_9 : i32
    scf.if %11 {
      %c0_10 = arith.constant 0 : index
      %c0_11 = arith.constant 0 : index
      %12 = vector.load %arg6[%c0_10, %c0_11] : memref<16x128xf32, #tpu.memory_space<vmem>>, vector<16x128xf32>
      %cst_12 = arith.constant 0.000000e+00 : f32
      %13 = vector.broadcast %cst_12 : f32 to vector<16x128xf32>
      %14 = arith.maximumf %12, %13 : vector<16x128xf32>
      %c0_13 = arith.constant 0 : index
      %c0_14 = arith.constant 0 : index
      %15 = vector.load %arg6[%c0_13, %c0_14] : memref<16x128xf32, #tpu.memory_space<vmem>>, vector<16x128xf32>
      tpu.vector_store %arg6[%c0_13, %c0_14], %14 {strides = array<i32>} : memref<16x128xf32, #tpu.memory_space<vmem>>, vector<16x128xf32>,
    } else {
    }
    return
  }
  func.func @transform_0(%arg0: i32, %arg1: i32, %arg2: i32) -> (i32, i32) {
    %c0_i32 = arith.constant 0 : i32
    return %arg0, %arg2 : i32, i32
  }
  func.func @transform_1(%arg0: i32, %arg1: i32, %arg2: i32) -> (i32, i32) {
    %c0_i32 = arith.constant 0 : i32
    return %arg2, %arg1 : i32, i32
  }
  func.func @transform_2(%arg0: i32, %arg1: i32, %arg2: i32) -> (i32, i32) {
    %c0_i32 = arith.constant 0 : i32
    %c0_i32_0 = arith.constant 0 : i32
    return %c0_i32, %arg1 : i32, i32
  }
  func.func @transform_3(%arg0: i32, %arg1: i32, %arg2: i32) -> (i32, i32) {
    %c0_i32 = arith.constant 0 : i32
    return %arg0, %arg1 : i32, i32
  }
}

</mosaic_0001>

<llo_original>
// kernel: tpu_custom_call.1
$region0: #{tpu_custom_call.1}
  #allocation0 [shape = 'u32[]', space=smem, size = 0x4, offset = 0x4, fixed_abs, tag = 'smem constant byte address 0x4 - core index']
  #allocation1 [shape = 'u32[144,128]{1,0:T(1,128)}', space=vmem, size = 0x12000, scoped, tag = 'internal scratch']
  %s0 = inlined_call_operand.hbm [shape: f32[16,128], index: 0, kind: input, shape index: {}]
  %s1 = inlined_call_operand.hbm [shape: f32[128,128], index: 1, kind: input, shape index: {}]
  %s2 = inlined_call_operand.vmem [shape: f32[1,128], index: 2, kind: input, shape index: {}]
  %s3 = inlined_call_operand.hbm [shape: f32[16,128], index: 3, kind: output, shape index: {}]
  %s4 = sld [smem:[#allocation0]]
  $region38: #{tpu_custom_call.1} parent=0
    _
  %s6 = ssub.s32 1, %s4
  %s7 = scalar_select 0, %s6, %s4
  $region1: #{tpu_custom_call.1} parent=0
    #allocation2 [shape = 'u8[8192]{0}', space=vmem, size = 0x2000, scoped, tag = 'input window, operand 0, single buffered']
    #allocation3 [shape = 's32[1]{0}', space=sflag, size = 0x4, scoped, tag = 'scoped memory for tpu_custom_call.1']
    #allocation4 [shape = 's32[1]{0}', space=sflag, size = 0x4, scoped, tag = 'scoped memory for tpu_custom_call.1']
    #allocation5 [shape = 'u8[65536]{0}', space=vmem, size = 0x10000, scoped, tag = 'input window, operand 1, single buffered']
    #allocation6 [shape = 's32[1]{0}', space=sflag, size = 0x4, scoped, tag = 'scoped memory for tpu_custom_call.1']
    #allocation7 [shape = 'u8[8192]{0}', space=vmem, size = 0x2000, scoped, tag = 'output window, operand 0, single buffered']
    %8 = vsyncpa [#allocation3], 0
    %9 = vsyncpa [#allocation6], 0
    %10 = vsyncpa [#allocation4], 0
    // Predicated region
    $region2: #{tpu_custom_call.1} parent=1 // pred_check
      _
    $region3: #{tpu_custom_call.1} parent=1 // pred_check_branch
      %12 = sbr.rel (0) target = $region5
    $region4: #{tpu_custom_call.1} parent=1 // pred_region
      %s14 = ssub.s32 256, 256
      %15 = vsyncadd [#allocation3], %s14
      %s16 = sshll.u32 [#allocation2], 4
      %s17 = int_to_ptr.vmem [resolvable:$true] %s16
      %22 = dma.hbm_to_vmem [thread:$0]  %s0, 256, %s17, [#allocation3], 128, 128, 8
    $region5: #{tpu_custom_call.1} parent=1 // pred_fallthru
      _
    // Predicated region
    $region6: #{tpu_custom_call.1} parent=1 // pred_check
      _
    $region7: #{tpu_custom_call.1} parent=1 // pred_check_branch
      %24 = sbr.rel (0) target = $region9
    $region8: #{tpu_custom_call.1} parent=1 // pred_region
      %s26 = ssub.s32 2048, 2048
      %27 = vsyncadd [#allocation6], %s26
      %s28 = sshll.u32 [#allocation5], 4
      %s29 = int_to_ptr.vmem [resolvable:$true] %s28
      %34 = dma.hbm_to_vmem [thread:$0]  %s1, 2048, %s29, [#allocation6], 128, 128, 8
    $region9: #{tpu_custom_call.1} parent=1 // pred_fallthru
      _
    // Predicated region
    $region10: #{tpu_custom_call.1} parent=1 // pred_check
      _
    $region11: #{tpu_custom_call.1} parent=1 // pred_check_branch
      %36 = sbr.rel (0) target = $region13
    $region12: #{tpu_custom_call.1} parent=1 // pred_region
      _
    $region13: #{tpu_custom_call.1} parent=1 // pred_fallthru
      _
    // Predicated region
    $region14: #{tpu_custom_call.1} parent=1 // pred_check
      _
    $region15: #{tpu_custom_call.1} parent=1 // pred_check_branch
      %38 = sbr.rel (0) target = $region17
    $region16: #{tpu_custom_call.1} parent=1 // pred_region
      %39 = dma.done [#allocation3], 256
    $region17: #{tpu_custom_call.1} parent=1 // pred_fallthru
      _
    // Predicated region
    $region18: #{tpu_custom_call.1} parent=1 // pred_check
      _
    $region19: #{tpu_custom_call.1} parent=1 // pred_check_branch
      %41 = sbr.rel (0) target = $region21
    $region20: #{tpu_custom_call.1} parent=1 // pred_region
      %42 = dma.done [#allocation6], 2048
    $region21: #{tpu_custom_call.1} parent=1 // pred_fallthru
      _
    %p43 = scmp.eq.s32.totalorder 0, 0
    // Predicated region
    $region22: #{tpu_custom_call.1} parent=1 // pred_check
      %p44 = pneg %p43
    $region23: #{tpu_custom_call.1} parent=1 // pred_check_branch
      %46 = sbr.rel (%p44) target = $region25
    $region24: #{tpu_custom_call.1} parent=1 // pred_region
      %v47 = vld [vmem:[%s2] sm:$0x1]
      %v49 = vlaneseq
      %v50 = vshrl.u32 %v49, 7
      %v51 = vsub.s32 0, %v50
      %v52 = vrot.slane %v47, %v51
      %54 = vst [vmem:[#allocation7] sm:$0xff] %v52
      %55 = vst [vmem:[#allocation7 + $0x8] sm:$0xff] %v52
    $region25: #{tpu_custom_call.1} parent=1 // pred_fallthru
      _
    %v56 = vld [vmem:[#allocation7] sm:$0xff]
    %v57 = vld [vmem:[#allocation7 + $0x8] sm:$0xff]
    %v58 = vld [vmem:[#allocation2] sm:$0xff]
    %v59 = vld [vmem:[#allocation2 + $0x8] sm:$0xff]
    %v60 = vld [vmem:[#allocation5] sm:$0xff]
    %v61 = vld [vmem:[#allocation5 + $0x8] sm:$0xff]
    %v62 = vld [vmem:[#allocation5 + $0x10] sm:$0xff]
    %v63 = vld [vmem:[#allocation5 + $0x18] sm:$0xff]
    %v64 = vld [vmem:[#allocation5 + $0x20] sm:$0xff]
    %v65 = vld [vmem:[#allocation5 + $0x28] sm:$0xff]
    %v66 = vld [vmem:[#allocation5 + $0x30] sm:$0xff]
    %v67 = vld [vmem:[#allocation5 + $0x38] sm:$0xff]
    %v68 = vld [vmem:[#allocation5 + $0x40] sm:$0xff]
    %v69 = vld [vmem:[#allocation5 + $0x48] sm:$0xff]
    %v70 = vld [vmem:[#allocation5 + $0x50] sm:$0xff]
    %v71 = vld [vmem:[#allocation5 + $0x58] sm:$0xff]
    %v72 = vld [vmem:[#allocation5 + $0x60] sm:$0xff]
    %v73 = vld [vmem:[#allocation5 + $0x68] sm:$0xff]
    %v74 = vld [vmem:[#allocation5 + $0x70] sm:$0xff]
    %v75 = vld [vmem:[#allocation5 + $0x78] sm:$0xff]
    %76 = vmatprep.subr.mxu0 0.0
    %77 = vmatpush1.msra.mxu0 %v60
    %78 = vmatprep.subr.mxu0 0.0
    %79 = vmatpush1.msra.mxu0 %v61
    %80 = vmatprep.subr.mxu0 0.0
    %81 = vmatpush1.msra.mxu0 %v62
    %82 = vmatprep.subr.mxu0 0.0
    %83 = vmatpush1.msra.mxu0 %v63
    %84 = vmatprep.subr.mxu0 0.0
    %85 = vmatpush1.msra.mxu0 %v64
    %86 = vmatprep.subr.mxu0 0.0
    %87 = vmatpush1.msra.mxu0 %v65
    %88 = vmatprep.subr.mxu0 0.0
    %89 = vmatpush1.msra.mxu0 %v66
    %90 = vmatprep.subr.mxu0 0.0
    %91 = vmatpush1.msra.mxu0 %v67
    %92 = vmatprep.subr.mxu0 0.0
    %93 = vmatpush1.msra.mxu0 %v68
    %94 = vmatprep.subr.mxu0 0.0
    %95 = vmatpush1.msra.mxu0 %v69
    %96 = vmatprep.subr.mxu0 0.0
    %97 = vmatpush1.msra.mxu0 %v70
    %98 = vmatprep.subr.mxu0 0.0
    %99 = vmatpush1.msra.mxu0 %v71
    %100 = vmatprep.subr.mxu0 0.0
    %101 = vmatpush1.msra.mxu0 %v72
    %102 = vmatprep.subr.mxu0 0.0
    %103 = vmatpush1.msra.mxu0 %v73
    %104 = vmatprep.subr.mxu0 0.0
    %105 = vmatpush1.msra.mxu0 %v74
    %106 = vmatprep.subr.mxu0 0.0
    %107 = vmatpush1.msra.mxu0 %v75
    %108 = vmatprep.subr.mxu0 0.0
    %109 = vmatpush1.msra.mxu0 0.0
    %110 = vmatprep.subr.mxu0 0.0
    %111 = vmatpush1.msra.mxu0 0.0
    %112 = vmatprep.subr.mxu0 0.0
    %113 = vmatpush1.msra.mxu0 0.0
    %114 = vmatprep.subr.mxu0 0.0
    %115 = vmatpush1.msra.mxu0 0.0
    %116 = vmatprep.subr.mxu0 0.0
    %117 = vmatpush1.msra.mxu0 0.0
    %118 = vmatprep.subr.mxu0 0.0
    %119 = vmatpush1.msra.mxu0 0.0
    %120 = vmatprep.subr.mxu0 0.0
    %121 = vmatpush1.msra.mxu0 0.0
    %122 = vmatprep.subr.mxu0 0.0
    %123 = vmatpush1.msra.mxu0 0.0
    %124 = vmatprep.subr.mxu0 0.0
    %125 = vmatpush1.msra.mxu0 0.0
    %126 = vmatprep.subr.mxu0 0.0
    %127 = vmatpush1.msra.mxu0 0.0
    %128 = vmatprep.subr.mxu0 0.0
    %129 = vmatpush1.msra.mxu0 0.0
    %130 = vmatprep.subr.mxu0 0.0
    %131 = vmatpush1.msra.mxu0 0.0
    %132 = vmatprep.subr.mxu0 0.0
    %133 = vmatpush1.msra.mxu0 0.0
    %134 = vmatprep.subr.mxu0 0.0
    %135 = vmatpush1.msra.mxu0 0.0
    %136 = vmatprep.subr.mxu0 0.0
    %137 = vmatpush1.msra.mxu0 0.0
    %138 = vmatprep.subr.mxu0 0.0
    %139 = vmatpush1.msra.mxu0 0.0
    %140 = vmatprep.mubr.f32.mxu0 0.0
    %141 = vmatmul.mubr.f32.gmra.mrb[0].mxu0 %v58
    %v142 = vpop.f32.mrb[0].mxu0
    %v143 = vadd.f32 0.0, %v142
    %v144 = vpop.f32.mrb[0].mxu0
    %145 = vmatprep.mubr.f32.mxu0 0.0
    %146 = vmatmul.mubr.f32.gmra.mrb[0].mxu0 %v59
    %v147 = vpop.f32.mrb[0].mxu0
    %v148 = vadd.f32 0.0, %v147
    %v149 = vpop.f32.mrb[0].mxu0
    %150 = vdwg.mxu0
    %v151 = vadd.f32 %v56, %v143
    %v152 = vadd.f32 %v57, %v148
    %153 = vst [vmem:[#allocation7] sm:$0xff] %v151
    %154 = vst [vmem:[#allocation7 + $0x8] sm:$0xff] %v152
    // Predicated region
    $region26: #{tpu_custom_call.1} parent=1 // pred_check
      %p155 = pneg %p43
    $region27: #{tpu_custom_call.1} parent=1 // pred_check_branch
      %157 = sbr.rel (%p155) target = $region29
    $region28: #{tpu_custom_call.1} parent=1 // pred_region
      %v158 = vld [vmem:[#allocation7] sm:$0xff]
      %v159 = vld [vmem:[#allocation7 + $0x8] sm:$0xff]
      %v160 = vmax.f32 %v158, 0.0
      %v161 = vmax.f32 %v159, 0.0
      %162 = vst [vmem:[#allocation7] sm:$0xff] %v160
      %163 = vst [vmem:[#allocation7 + $0x8] sm:$0xff] %v161
    $region29: #{tpu_custom_call.1} parent=1 // pred_fallthru
      _
    // Predicated region
    $region30: #{tpu_custom_call.1} parent=1 // pred_check
      _
    $region31: #{tpu_custom_call.1} parent=1 // pred_check_branch
      %165 = sbr.rel (0) target = $region33
    $region32: #{tpu_custom_call.1} parent=1 // pred_region
      %s167 = ssub.s32 256, 256
      %168 = vsyncadd [#allocation4], %s167
      %s169 = sshll.u32 [#allocation7], 4
      %s170 = int_to_ptr.vmem [resolvable:$true] %s169
      %175 = dma.vmem_to_hbm [thread:$0]  %s170, 256, %s3, [#allocation4], 128, 128, 8
    $region33: #{tpu_custom_call.1} parent=1 // pred_fallthru
      _
    // Predicated region
    $region34: #{tpu_custom_call.1} parent=1 // pred_check
      _
    $region35: #{tpu_custom_call.1} parent=1 // pred_check_branch
      %177 = sbr.rel (0) target = $region37
    $region36: #{tpu_custom_call.1} parent=1 // pred_region
      %178 = dma.done [#allocation4], 256
    $region37: #{tpu_custom_call.1} parent=1 // pred_fallthru
      _
    %179 = vsyncpa [#allocation3], 1
    %180 = vsyncpa [#allocation6], 1
    %181 = vsyncpa [#allocation4], 1

</llo_original>
